<compile_context>
chip_gen: v6e
topology: v6e:2x2x1
jax: 0.10.0
libtpu: 0.0.40
codegen_flags: <defaults>
</compile_context>

<pallas_src>
import functools

import jax
import jax.numpy as jnp
from jax.experimental import pallas as pl
from jax.experimental.pallas import tpu as pltpu

N_HIDDEN_REPEAT = 8     # 8 extra (64 -> 64) layers after the first (3 -> 64)
IN_DIM = 3
HID = 64
OUT_DIM = 3
OUT_PAD = 128           # lane-dense output width (zero-padded, sliced off outside)
TM = 256                # max batch tile: multiple of 256 (v6e/v7x MXU rows) and 128 (v5e)


def mlp_kernel(x_ref, w0_ref, b0_ref, ws_ref, bs_ref, wo_ref, bo_ref, o_ref):
    x = x_ref[...]                                           # (tm, 3)  f32

    # ---- layer 0 (3 -> 64) on the VPU: K=3 broadcast FMAs, skip the MXU pass. ----
    h = (x[:, 0:1] * w0_ref[0:1, :]
         + x[:, 1:2] * w0_ref[1:2, :]
         + x[:, 2:3] * w0_ref[2:3, :]
         + b0_ref[...])
    h = jnp.tanh(h)                                          # (tm, 64) f32

    # ---- 8 hidden (64 -> 64) layers: bf16 at the MXU, f32 accumulate, f32 tanh. ----
    for i in range(N_HIDDEN_REPEAT):                         # static unroll
        h = jnp.tanh(
            jnp.dot(h.astype(jnp.bfloat16), ws_ref[i],
                    preferred_element_type=jnp.float32)
            + bs_ref[i]
        )

    # ---- output layer (64 -> 128 padded), no activation; lane-dense unmasked store. ----
    o_ref[...] = (
        jnp.dot(h.astype(jnp.bfloat16), wo_ref[...],
                preferred_element_type=jnp.float32)
        + bo_ref[...]
    ).astype(o_ref.dtype)


@functools.partial(jax.jit, static_argnames=("tm",))
def deep_model_forward(x, params, *, tm=TM):
    w0, b0, ws, bs, wo, bo = params
    n = x.shape[0]

    # Shrink the batch tile for small batches (keep sublane-aligned multiple of 8).
    tm_eff = min(tm, max(8, ((n + 7) // 8) * 8))
    n_tiles = pl.cdiv(n, tm_eff)
    n_pad = n_tiles * tm_eff
    if n_pad != n:
        x = jnp.pad(x, ((0, n_pad - n), (0, 0)))             # pad partial batch tile

    # MXU-facing weights in bf16; biases and the tiny VPU layer-0 weights stay f32.
    ws_bf = ws.astype(jnp.bfloat16)                                          # (8,64,64)
    wo_bf = jnp.pad(wo, ((0, 0), (0, OUT_PAD - OUT_DIM))).astype(jnp.bfloat16)
    bo_pad = jnp.pad(bo, ((0, 0), (0, OUT_PAD - OUT_DIM)))

    flops = 2 * n_pad * (IN_DIM * HID + N_HIDDEN_REPEAT * HID * HID + HID * OUT_DIM)
    trans = (1 + N_HIDDEN_REPEAT) * n_pad * HID
    param_bytes = (ws_bf.size * 2 + wo_bf.size * 2
                   + (w0.size + b0.size + bs.size + bo_pad.size) * 4)
    bytes_accessed = n_pad * IN_DIM * 4 + n_pad * OUT_PAD * 4 + param_bytes

    out = pl.pallas_call(
        mlp_kernel,
        out_shape=jax.ShapeDtypeStruct((n_pad, OUT_PAD), jnp.float32),
        grid=(n_tiles,),
        in_specs=[
            pl.BlockSpec((tm_eff, IN_DIM), lambda i: (i, 0)),                # x tile
            pl.BlockSpec((IN_DIM, HID), lambda i: (0, 0)),                   # w0 (resident)
            pl.BlockSpec((1, HID), lambda i: (0, 0)),                        # b0
            pl.BlockSpec((N_HIDDEN_REPEAT, HID, HID), lambda i: (0, 0, 0)),  # ws (bf16)
            pl.BlockSpec((N_HIDDEN_REPEAT, 1, HID), lambda i: (0, 0, 0)),    # bs
            pl.BlockSpec((HID, OUT_PAD), lambda i: (0, 0)),                  # wo (padded)
            pl.BlockSpec((1, OUT_PAD), lambda i: (0, 0)),                    # bo (padded)
        ],
        out_specs=pl.BlockSpec((tm_eff, OUT_PAD), lambda i: (i, 0)),
        compiler_params=pltpu.CompilerParams(
            dimension_semantics=("parallel",)),
        cost_estimate=pl.CostEstimate(
            flops=flops, transcendentals=trans, bytes_accessed=bytes_accessed),
    )(x, w0, b0, ws_bf, bs, wo_bf, bo_pad)

    return out[:n, :OUT_DIM]


def init_params(key):
    """PyTorch nn.Linear-style init: U(-1/sqrt(fan_in), 1/sqrt(fan_in)) for W and b."""
    n_linear = 1 + N_HIDDEN_REPEAT + 1
    ks = jax.random.split(key, 2 * n_linear)

    def lin(kw, kb, fan_in, fan_out):
        bound = 1.0 / (fan_in ** 0.5)
        w = jax.random.uniform(kw, (fan_in, fan_out), jnp.float32, -bound, bound)
        b = jax.random.uniform(kb, (1, fan_out), jnp.float32, -bound, bound)
        return w, b

    w0, b0 = lin(ks[0], ks[1], IN_DIM, HID)
    ws_list, bs_list = [], []
    for i in range(N_HIDDEN_REPEAT):
        w, b = lin(ks[2 + 2 * i], ks[3 + 2 * i], HID, HID)
        ws_list.append(w)
        bs_list.append(b)
    ws = jnp.stack(ws_list, axis=0)                 # (8, 64, 64)
    bs = jnp.stack(bs_list, axis=0)                 # (8, 1, 64)
    wo, bo = lin(ks[-2], ks[-1], HID, OUT_DIM)
    return w0, b0, ws, bs, wo, bo


def reference_forward(x, params):
    """Pure-JAX reference mirroring the kernel's math exactly
    (f32 layer 0, bf16-operand / f32-accumulate hidden & output matmuls, f32 tanh)."""
    w0, b0, ws, bs, wo, bo = params
    h = jnp.tanh(x @ w0 + b0)
    for i in range(N_HIDDEN_REPEAT):
        h = jnp.tanh(
            jnp.dot(h.astype(jnp.bfloat16), ws[i].astype(jnp.bfloat16),
                    preferred_element_type=jnp.float32) + bs[i])
    return jnp.dot(h.astype(jnp.bfloat16), wo.astype(jnp.bfloat16),
                   preferred_element_type=jnp.float32) + bo


def reference_forward_f32(x, params):
    """Full-precision reference (matches PyTorch f32 semantics)."""
    w0, b0, ws, bs, wo, bo = params
    h = jnp.tanh(x @ w0 + b0)
    for i in range(N_HIDDEN_REPEAT):
        h = jnp.tanh(h @ ws[i] + bs[i])
    return h @ wo + bo


if __name__ == "__main__":
    key = jax.random.PRNGKey(0)
    pkey, xkey = jax.random.split(key)
    params = init_params(pkey)

    batch = 8
    x = jax.random.normal(xkey, (batch, IN_DIM), jnp.float32)

    out = deep_model_forward(x, params)
    out = jax.block_until_ready(out)
    assert out.shape == (batch, OUT_DIM)

    # Exact-path check (same bf16-at-MXU math as the kernel).
    ref = reference_forward(x, params)
    assert jnp.allclose(out, ref, atol=1e-4, rtol=1e-4), "mismatch vs bf16 reference"

    # Looser check against the full-f32 PyTorch-equivalent math.
    ref32 = reference_forward_f32(x, params)
    assert jnp.allclose(out, ref32, atol=3e-2, rtol=3e-2), "mismatch vs f32 reference"

    print("KERNEL_OK")
</pallas_src>

<mosaic_0001>
module attributes {stable_mosaic.version = 11 : i64} {
  func.func @mlp_kernel(%arg0: i32, %arg1: memref<8x3xf32, #tpu.memory_space<vmem>>, %arg2: memref<3x64xf32, #tpu.memory_space<vmem>>, %arg3: memref<1x64xf32, #tpu.memory_space<vmem>>, %arg4: memref<8x64x64xbf16, #tpu.memory_space<vmem>>, %arg5: memref<8x1x64xf32, #tpu.memory_space<vmem>>, %arg6: memref<64x128xbf16, #tpu.memory_space<vmem>>, %arg7: memref<1x128xf32, #tpu.memory_space<vmem>>, %arg8: memref<8x128xf32, #tpu.memory_space<vmem>>) attributes {dimension_semantics = [#tpu.dimension_semantics<parallel>], iteration_bounds = array<i64: 1>, scalar_prefetch = 0 : i64, scratch_operands = 0 : i64, tpu.core_type = #tpu.core_type<tc>, window_params = [{transform_indices = @transform_0, window_bounds = array<i64: 8, 3>}, {pipeline_mode = #tpu.pipeline_mode<synchronous>, transform_indices = @transform_1, window_bounds = array<i64: 3, 64>}, {pipeline_mode = #tpu.pipeline_mode<synchronous>, transform_indices = @transform_2, window_bounds = array<i64: 1, 64>}, {pipeline_mode = #tpu.pipeline_mode<synchronous>, transform_indices = @transform_3, window_bounds = array<i64: 8, 64, 64>}, {pipeline_mode = #tpu.pipeline_mode<synchronous>, transform_indices = @transform_4, window_bounds = array<i64: 8, 1, 64>}, {pipeline_mode = #tpu.pipeline_mode<synchronous>, transform_indices = @transform_5, window_bounds = array<i64: 64, 128>}, {pipeline_mode = #tpu.pipeline_mode<synchronous>, transform_indices = @transform_6, window_bounds = array<i64: 1, 128>}, {transform_indices = @transform_7, window_bounds = array<i64: 8, 128>}]} {
    %c0 = arith.constant 0 : index
    %c0_0 = arith.constant 0 : index
    %0 = vector.load %arg1[%c0, %c0_0] : memref<8x3xf32, #tpu.memory_space<vmem>>, vector<8x3xf32>
    %1 = vector.extract_strided_slice %0 {offsets = [0, 0], sizes = [8, 1], strides = [1, 1]} : vector<8x3xf32> to vector<8x1xf32>
    %c0_1 = arith.constant 0 : index
    %c0_2 = arith.constant 0 : index
    %2 = vector.load %arg2[%c0_1, %c0_2] : memref<3x64xf32, #tpu.memory_space<vmem>>, vector<1x64xf32>
    %3 = vector.broadcast %1 : vector<8x1xf32> to vector<8x64xf32>
    %4 = vector.broadcast %2 : vector<1x64xf32> to vector<8x64xf32>
    %5 = arith.mulf %3, %4 : vector<8x64xf32>
    %6 = vector.extract_strided_slice %0 {offsets = [0, 1], sizes = [8, 1], strides = [1, 1]} : vector<8x3xf32> to vector<8x1xf32>
    %c1 = arith.constant 1 : index
    %c0_3 = arith.constant 0 : index
    %7 = vector.load %arg2[%c1, %c0_3] : memref<3x64xf32, #tpu.memory_space<vmem>>, vector<1x64xf32>
    %8 = vector.broadcast %6 : vector<8x1xf32> to vector<8x64xf32>
    %9 = vector.broadcast %7 : vector<1x64xf32> to vector<8x64xf32>
    %10 = arith.mulf %8, %9 : vector<8x64xf32>
    %11 = arith.addf %5, %10 : vector<8x64xf32>
    %12 = vector.extract_strided_slice %0 {offsets = [0, 2], sizes = [8, 1], strides = [1, 1]} : vector<8x3xf32> to vector<8x1xf32>
    %c2 = arith.constant 2 : index
    %c0_4 = arith.constant 0 : index
    %13 = vector.load %arg2[%c2, %c0_4] : memref<3x64xf32, #tpu.memory_space<vmem>>, vector<1x64xf32>
    %14 = vector.broadcast %12 : vector<8x1xf32> to vector<8x64xf32>
    %15 = vector.broadcast %13 : vector<1x64xf32> to vector<8x64xf32>
    %16 = arith.mulf %14, %15 : vector<8x64xf32>
    %17 = arith.addf %11, %16 : vector<8x64xf32>
    %c0_5 = arith.constant 0 : index
    %c0_6 = arith.constant 0 : index
    %18 = vector.load %arg3[%c0_5, %c0_6] : memref<1x64xf32, #tpu.memory_space<vmem>>, vector<1x64xf32>
    %19 = vector.broadcast %18 : vector<1x64xf32> to vector<8x64xf32>
    %20 = arith.addf %17, %19 : vector<8x64xf32>
    %21 = math.tanh %20 : vector<8x64xf32>
    %22 = arith.truncf %21 : vector<8x64xf32> to vector<8x64xbf16>
    %c0_7 = arith.constant 0 : index
    %c0_8 = arith.constant 0 : index
    %c0_9 = arith.constant 0 : index
    %23 = vector.load %arg4[%c0_7, %c0_8, %c0_9] : memref<8x64x64xbf16, #tpu.memory_space<vmem>>, vector<1x64x64xbf16>
    %24 = vector.shape_cast %23 : vector<1x64x64xbf16> to vector<64x64xbf16>
    %cst = arith.constant dense<0.000000e+00> : vector<8x64xf32>
    %25 = tpu.matmul %22, %24, %cst {dimension_numbers = #tpu.dot_dimension_numbers<[1], [0], [0], [1], [0, 0, 1, 1], [], []>} : vector<8x64xbf16>, vector<64x64xbf16>, vector<8x64xf32> -> vector<8x64xf32>
    %c0_10 = arith.constant 0 : index
    %c0_11 = arith.constant 0 : index
    %c0_12 = arith.constant 0 : index
    %26 = vector.load %arg5[%c0_10, %c0_11, %c0_12] : memref<8x1x64xf32, #tpu.memory_space<vmem>>, vector<1x1x64xf32>
    %27 = vector.shape_cast %26 : vector<1x1x64xf32> to vector<1x64xf32>
    %28 = vector.broadcast %27 : vector<1x64xf32> to vector<8x64xf32>
    %29 = arith.addf %25, %28 : vector<8x64xf32>
    %30 = math.tanh %29 : vector<8x64xf32>
    %31 = arith.truncf %30 : vector<8x64xf32> to vector<8x64xbf16>
    %c1_13 = arith.constant 1 : index
    %c0_14 = arith.constant 0 : index
    %c0_15 = arith.constant 0 : index
    %32 = vector.load %arg4[%c1_13, %c0_14, %c0_15] : memref<8x64x64xbf16, #tpu.memory_space<vmem>>, vector<1x64x64xbf16>
    %33 = vector.shape_cast %32 : vector<1x64x64xbf16> to vector<64x64xbf16>
    %cst_16 = arith.constant dense<0.000000e+00> : vector<8x64xf32>
    %34 = tpu.matmul %31, %33, %cst_16 {dimension_numbers = #tpu.dot_dimension_numbers<[1], [0], [0], [1], [0, 0, 1, 1], [], []>} : vector<8x64xbf16>, vector<64x64xbf16>, vector<8x64xf32> -> vector<8x64xf32>
    %c1_17 = arith.constant 1 : index
    %c0_18 = arith.constant 0 : index
    %c0_19 = arith.constant 0 : index
    %35 = vector.load %arg5[%c1_17, %c0_18, %c0_19] : memref<8x1x64xf32, #tpu.memory_space<vmem>>, vector<1x1x64xf32>
    %36 = vector.shape_cast %35 : vector<1x1x64xf32> to vector<1x64xf32>
    %37 = vector.broadcast %36 : vector<1x64xf32> to vector<8x64xf32>
    %38 = arith.addf %34, %37 : vector<8x64xf32>
    %39 = math.tanh %38 : vector<8x64xf32>
    %40 = arith.truncf %39 : vector<8x64xf32> to vector<8x64xbf16>
    %c2_20 = arith.constant 2 : index
    %c0_21 = arith.constant 0 : index
    %c0_22 = arith.constant 0 : index
    %41 = vector.load %arg4[%c2_20, %c0_21, %c0_22] : memref<8x64x64xbf16, #tpu.memory_space<vmem>>, vector<1x64x64xbf16>
    %42 = vector.shape_cast %41 : vector<1x64x64xbf16> to vector<64x64xbf16>
    %cst_23 = arith.constant dense<0.000000e+00> : vector<8x64xf32>
    %43 = tpu.matmul %40, %42, %cst_23 {dimension_numbers = #tpu.dot_dimension_numbers<[1], [0], [0], [1], [0, 0, 1, 1], [], []>} : vector<8x64xbf16>, vector<64x64xbf16>, vector<8x64xf32> -> vector<8x64xf32>
    %c2_24 = arith.constant 2 : index
    %c0_25 = arith.constant 0 : index
    %c0_26 = arith.constant 0 : index
    %44 = vector.load %arg5[%c2_24, %c0_25, %c0_26] : memref<8x1x64xf32, #tpu.memory_space<vmem>>, vector<1x1x64xf32>
    %45 = vector.shape_cast %44 : vector<1x1x64xf32> to vector<1x64xf32>
    %46 = vector.broadcast %45 : vector<1x64xf32> to vector<8x64xf32>
    %47 = arith.addf %43, %46 : vector<8x64xf32>
    %48 = math.tanh %47 : vector<8x64xf32>
    %49 = arith.truncf %48 : vector<8x64xf32> to vector<8x64xbf16>
    %c3 = arith.constant 3 : index
    %c0_27 = arith.constant 0 : index
    %c0_28 = arith.constant 0 : index
    %50 = vector.load %arg4[%c3, %c0_27, %c0_28] : memref<8x64x64xbf16, #tpu.memory_space<vmem>>, vector<1x64x64xbf16>
    %51 = vector.shape_cast %50 : vector<1x64x64xbf16> to vector<64x64xbf16>
    %cst_29 = arith.constant dense<0.000000e+00> : vector<8x64xf32>
    %52 = tpu.matmul %49, %51, %cst_29 {dimension_numbers = #tpu.dot_dimension_numbers<[1], [0], [0], [1], [0, 0, 1, 1], [], []>} : vector<8x64xbf16>, vector<64x64xbf16>, vector<8x64xf32> -> vector<8x64xf32>
    %c3_30 = arith.constant 3 : index
    %c0_31 = arith.constant 0 : index
    %c0_32 = arith.constant 0 : index
    %53 = vector.load %arg5[%c3_30, %c0_31, %c0_32] : memref<8x1x64xf32, #tpu.memory_space<vmem>>, vector<1x1x64xf32>
    %54 = vector.shape_cast %53 : vector<1x1x64xf32> to vector<1x64xf32>
    %55 = vector.broadcast %54 : vector<1x64xf32> to vector<8x64xf32>
    %56 = arith.addf %52, %55 : vector<8x64xf32>
    %57 = math.tanh %56 : vector<8x64xf32>
    %58 = arith.truncf %57 : vector<8x64xf32> to vector<8x64xbf16>
    %c4 = arith.constant 4 : index
    %c0_33 = arith.constant 0 : index
    %c0_34 = arith.constant 0 : index
    %59 = vector.load %arg4[%c4, %c0_33, %c0_34] : memref<8x64x64xbf16, #tpu.memory_space<vmem>>, vector<1x64x64xbf16>
    %60 = vector.shape_cast %59 : vector<1x64x64xbf16> to vector<64x64xbf16>
    %cst_35 = arith.constant dense<0.000000e+00> : vector<8x64xf32>
    %61 = tpu.matmul %58, %60, %cst_35 {dimension_numbers = #tpu.dot_dimension_numbers<[1], [0], [0], [1], [0, 0, 1, 1], [], []>} : vector<8x64xbf16>, vector<64x64xbf16>, vector<8x64xf32> -> vector<8x64xf32>
    %c4_36 = arith.constant 4 : index
    %c0_37 = arith.constant 0 : index
    %c0_38 = arith.constant 0 : index
    %62 = vector.load %arg5[%c4_36, %c0_37, %c0_38] : memref<8x1x64xf32, #tpu.memory_space<vmem>>, vector<1x1x64xf32>
    %63 = vector.shape_cast %62 : vector<1x1x64xf32> to vector<1x64xf32>
    %64 = vector.broadcast %63 : vector<1x64xf32> to vector<8x64xf32>
    %65 = arith.addf %61, %64 : vector<8x64xf32>
    %66 = math.tanh %65 : vector<8x64xf32>
    %67 = arith.truncf %66 : vector<8x64xf32> to vector<8x64xbf16>
    %c5 = arith.constant 5 : index
    %c0_39 = arith.constant 0 : index
    %c0_40 = arith.constant 0 : index
    %68 = vector.load %arg4[%c5, %c0_39, %c0_40] : memref<8x64x64xbf16, #tpu.memory_space<vmem>>, vector<1x64x64xbf16>
    %69 = vector.shape_cast %68 : vector<1x64x64xbf16> to vector<64x64xbf16>
    %cst_41 = arith.constant dense<0.000000e+00> : vector<8x64xf32>
    %70 = tpu.matmul %67, %69, %cst_41 {dimension_numbers = #tpu.dot_dimension_numbers<[1], [0], [0], [1], [0, 0, 1, 1], [], []>} : vector<8x64xbf16>, vector<64x64xbf16>, vector<8x64xf32> -> vector<8x64xf32>
    %c5_42 = arith.constant 5 : index
    %c0_43 = arith.constant 0 : index
    %c0_44 = arith.constant 0 : index
    %71 = vector.load %arg5[%c5_42, %c0_43, %c0_44] : memref<8x1x64xf32, #tpu.memory_space<vmem>>, vector<1x1x64xf32>
    %72 = vector.shape_cast %71 : vector<1x1x64xf32> to vector<1x64xf32>
    %73 = vector.broadcast %72 : vector<1x64xf32> to vector<8x64xf32>
    %74 = arith.addf %70, %73 : vector<8x64xf32>
    %75 = math.tanh %74 : vector<8x64xf32>
    %76 = arith.truncf %75 : vector<8x64xf32> to vector<8x64xbf16>
    %c6 = arith.constant 6 : index
    %c0_45 = arith.constant 0 : index
    %c0_46 = arith.constant 0 : index
    %77 = vector.load %arg4[%c6, %c0_45, %c0_46] : memref<8x64x64xbf16, #tpu.memory_space<vmem>>, vector<1x64x64xbf16>
    %78 = vector.shape_cast %77 : vector<1x64x64xbf16> to vector<64x64xbf16>
    %cst_47 = arith.constant dense<0.000000e+00> : vector<8x64xf32>
    %79 = tpu.matmul %76, %78, %cst_47 {dimension_numbers = #tpu.dot_dimension_numbers<[1], [0], [0], [1], [0, 0, 1, 1], [], []>} : vector<8x64xbf16>, vector<64x64xbf16>, vector<8x64xf32> -> vector<8x64xf32>
    %c6_48 = arith.constant 6 : index
    %c0_49 = arith.constant 0 : index
    %c0_50 = arith.constant 0 : index
    %80 = vector.load %arg5[%c6_48, %c0_49, %c0_50] : memref<8x1x64xf32, #tpu.memory_space<vmem>>, vector<1x1x64xf32>
    %81 = vector.shape_cast %80 : vector<1x1x64xf32> to vector<1x64xf32>
    %82 = vector.broadcast %81 : vector<1x64xf32> to vector<8x64xf32>
    %83 = arith.addf %79, %82 : vector<8x64xf32>
    %84 = math.tanh %83 : vector<8x64xf32>
    %85 = arith.truncf %84 : vector<8x64xf32> to vector<8x64xbf16>
    %c7 = arith.constant 7 : index
    %c0_51 = arith.constant 0 : index
    %c0_52 = arith.constant 0 : index
    %86 = vector.load %arg4[%c7, %c0_51, %c0_52] : memref<8x64x64xbf16, #tpu.memory_space<vmem>>, vector<1x64x64xbf16>
    %87 = vector.shape_cast %86 : vector<1x64x64xbf16> to vector<64x64xbf16>
    %cst_53 = arith.constant dense<0.000000e+00> : vector<8x64xf32>
    %88 = tpu.matmul %85, %87, %cst_53 {dimension_numbers = #tpu.dot_dimension_numbers<[1], [0], [0], [1], [0, 0, 1, 1], [], []>} : vector<8x64xbf16>, vector<64x64xbf16>, vector<8x64xf32> -> vector<8x64xf32>
    %c7_54 = arith.constant 7 : index
    %c0_55 = arith.constant 0 : index
    %c0_56 = arith.constant 0 : index
    %89 = vector.load %arg5[%c7_54, %c0_55, %c0_56] : memref<8x1x64xf32, #tpu.memory_space<vmem>>, vector<1x1x64xf32>
    %90 = vector.shape_cast %89 : vector<1x1x64xf32> to vector<1x64xf32>
    %91 = vector.broadcast %90 : vector<1x64xf32> to vector<8x64xf32>
    %92 = arith.addf %88, %91 : vector<8x64xf32>
    %93 = math.tanh %92 : vector<8x64xf32>
    %94 = arith.truncf %93 : vector<8x64xf32> to vector<8x64xbf16>
    %c0_57 = arith.constant 0 : index
    %c0_58 = arith.constant 0 : index
    %95 = vector.load %arg6[%c0_57, %c0_58] : memref<64x128xbf16, #tpu.memory_space<vmem>>, vector<64x128xbf16>
    %cst_59 = arith.constant dense<0.000000e+00> : vector<8x128xf32>
    %96 = tpu.matmul %94, %95, %cst_59 {dimension_numbers = #tpu.dot_dimension_numbers<[1], [0], [0], [1], [0, 0, 1, 1], [], []>} : vector<8x64xbf16>, vector<64x128xbf16>, vector<8x128xf32> -> vector<8x128xf32>
    %c0_60 = arith.constant 0 : index
    %c0_61 = arith.constant 0 : index
    %97 = vector.load %arg7[%c0_60, %c0_61] : memref<1x128xf32, #tpu.memory_space<vmem>>, vector<1x128xf32>
    %98 = vector.broadcast %97 : vector<1x128xf32> to vector<8x128xf32>
    %99 = arith.addf %96, %98 : vector<8x128xf32>
    %c0_62 = arith.constant 0 : index
    %c0_63 = arith.constant 0 : index
    %100 = vector.load %arg8[%c0_62, %c0_63] : memref<8x128xf32, #tpu.memory_space<vmem>>, vector<8x128xf32>
    tpu.vector_store %arg8[%c0_62, %c0_63], %99 {strides = array<i32>} : memref<8x128xf32, #tpu.memory_space<vmem>>, vector<8x128xf32>,
    return
  }
  func.func @transform_0(%arg0: i32) -> (i32, i32) {
    %c0_i32 = arith.constant 0 : i32
    %c0_i32_0 = arith.constant 0 : i32
    return %arg0, %c0_i32 : i32, i32
  }
  func.func @transform_1(%arg0: i32) -> (i32, i32) {
    %c0_i32 = arith.constant 0 : i32
    %c0_i32_0 = arith.constant 0 : i32
    %c0_i32_1 = arith.constant 0 : i32
    return %c0_i32, %c0_i32_0 : i32, i32
  }
  func.func @transform_2(%arg0: i32) -> (i32, i32) {
    %c0_i32 = arith.constant 0 : i32
    %c0_i32_0 = arith.constant 0 : i32
    %c0_i32_1 = arith.constant 0 : i32
    return %c0_i32, %c0_i32_0 : i32, i32
  }
  func.func @transform_3(%arg0: i32) -> (i32, i32, i32) {
    %c0_i32 = arith.constant 0 : i32
    %c0_i32_0 = arith.constant 0 : i32
    %c0_i32_1 = arith.constant 0 : i32
    %c0_i32_2 = arith.constant 0 : i32
    return %c0_i32, %c0_i32_0, %c0_i32_1 : i32, i32, i32
  }
  func.func @transform_4(%arg0: i32) -> (i32, i32, i32) {
    %c0_i32 = arith.constant 0 : i32
    %c0_i32_0 = arith.constant 0 : i32
    %c0_i32_1 = arith.constant 0 : i32
    %c0_i32_2 = arith.constant 0 : i32
    return %c0_i32, %c0_i32_0, %c0_i32_1 : i32, i32, i32
  }
  func.func @transform_5(%arg0: i32) -> (i32, i32) {
    %c0_i32 = arith.constant 0 : i32
    %c0_i32_0 = arith.constant 0 : i32
    %c0_i32_1 = arith.constant 0 : i32
    return %c0_i32, %c0_i32_0 : i32, i32
  }
  func.func @transform_6(%arg0: i32) -> (i32, i32) {
    %c0_i32 = arith.constant 0 : i32
    %c0_i32_0 = arith.constant 0 : i32
    %c0_i32_1 = arith.constant 0 : i32
    return %c0_i32, %c0_i32_0 : i32, i32
  }
  func.func @transform_7(%arg0: i32) -> (i32, i32) {
    %c0_i32 = arith.constant 0 : i32
    %c0_i32_0 = arith.constant 0 : i32
    return %arg0, %c0_i32 : i32, i32
  }
}

</mosaic_0001>

<llo_original>
// kernel: deep_model_forward.1
$region0: #{deep_model_forward.1}
  #allocation0 [shape = 'u32[]', space=smem, size = 0x4, offset = 0x4, fixed_abs, tag = 'smem constant byte address 0x4 - core index']
  #allocation1 [shape = 'u32[144,128]{1,0:T(1,128)}', space=vmem, size = 0x12000, scoped, tag = 'internal scratch']
  %s0 = inlined_call_operand.vmem [shape: f32[8,3], index: 0, kind: input, shape index: {}]
  %s1 = inlined_call_operand.vmem [shape: f32[3,64], index: 1, kind: input, shape index: {}]
  %s2 = inlined_call_operand.vmem [shape: f32[1,64], index: 2, kind: input, shape index: {}]
  %s3 = inlined_call_operand.vmem [shape: bf16[8,64,64], index: 3, kind: input, shape index: {}]
  %s4 = inlined_call_operand.vmem [shape: f32[8,1,64], index: 4, kind: input, shape index: {}]
  %s5 = inlined_call_operand.vmem [shape: bf16[64,128], index: 5, kind: input, shape index: {}]
  %s6 = inlined_call_operand.vmem [shape: f32[1,128], index: 6, kind: input, shape index: {}]
  %s7 = inlined_call_operand.vmem [shape: f32[8,128], index: 7, kind: output, shape index: {}]
  %s8 = sld [smem:[#allocation0]]
  $region38: #{deep_model_forward.1} parent=0
    _
  %s10 = ssub.s32 1, %s8
  %s11 = scalar_select 0, %s10, %s8
  // Predicated region
  $region2: #{deep_model_forward.1} parent=0 // pred_check
    _
  $region3: #{deep_model_forward.1} parent=0 // pred_check_branch
    %13 = sbr.rel (0) target = $region5
  $region4: #{deep_model_forward.1} parent=0 // pred_region
    _
  $region5: #{deep_model_forward.1} parent=0 // pred_fallthru
    _
  // Predicated region
  $region6: #{deep_model_forward.1} parent=0 // pred_check
    _
  $region7: #{deep_model_forward.1} parent=0 // pred_check_branch
    %15 = sbr.rel (0) target = $region9
  $region8: #{deep_model_forward.1} parent=0 // pred_region
    _
  $region9: #{deep_model_forward.1} parent=0 // pred_fallthru
    _
  // Predicated region
  $region10: #{deep_model_forward.1} parent=0 // pred_check
    _
  $region11: #{deep_model_forward.1} parent=0 // pred_check_branch
    %17 = sbr.rel (0) target = $region13
  $region12: #{deep_model_forward.1} parent=0 // pred_region
    _
  $region13: #{deep_model_forward.1} parent=0 // pred_fallthru
    _
  // Predicated region
  $region14: #{deep_model_forward.1} parent=0 // pred_check
    _
  $region15: #{deep_model_forward.1} parent=0 // pred_check_branch
    %19 = sbr.rel (0) target = $region17
  $region16: #{deep_model_forward.1} parent=0 // pred_region
    _
  $region17: #{deep_model_forward.1} parent=0 // pred_fallthru
    _
  // Predicated region
  $region18: #{deep_model_forward.1} parent=0 // pred_check
    _
  $region19: #{deep_model_forward.1} parent=0 // pred_check_branch
    %21 = sbr.rel (0) target = $region21
  $region20: #{deep_model_forward.1} parent=0 // pred_region
    _
  $region21: #{deep_model_forward.1} parent=0 // pred_fallthru
    _
  // Predicated region
  $region22: #{deep_model_forward.1} parent=0 // pred_check
    _
  $region23: #{deep_model_forward.1} parent=0 // pred_check_branch
    %23 = sbr.rel (0) target = $region25
  $region24: #{deep_model_forward.1} parent=0 // pred_region
    _
  $region25: #{deep_model_forward.1} parent=0 // pred_fallthru
    _
  // Predicated region
  $region26: #{deep_model_forward.1} parent=0 // pred_check
    _
  $region27: #{deep_model_forward.1} parent=0 // pred_check_branch
    %25 = sbr.rel (0) target = $region29
  $region28: #{deep_model_forward.1} parent=0 // pred_region
    _
  $region29: #{deep_model_forward.1} parent=0 // pred_fallthru
    _
  %v27 = vld [vmem:[%s0] sm:$0xff]
  %v28 = vld [vmem:[%s1] sm:$0x1]
  %30 = vset.pattern.permute.xlu0 0
  %31 = vperm.xlu0 %30, %v27
  %v32 = vpop.permute.xlu0 %31
  %v34 = vlaneseq
  %v35 = vshrl.u32 %v34, 7
  %v36 = vsub.s32 0, %v35
  %v37 = vrot.slane %v28, %v36
  %v38 = vmul.f32 %v32, %v37
  %v39 = vld [vmem:[%s1 + $0x1] sm:$0x1]
  %40 = vset.pattern.permute.xlu0 1
  %41 = vperm.xlu0 %40, %v27
  %v42 = vpop.permute.xlu0 %41
  %v44 = vlaneseq
  %v45 = vshrl.u32 %v44, 7
  %v46 = vsub.s32 0, %v45
  %v47 = vrot.slane %v39, %v46
  %v48 = vmul.f32 %v42, %v47
  %v49 = vadd.f32 %v38, %v48
  %v50 = vld [vmem:[%s1 + $0x2] sm:$0x1]
  %51 = vset.pattern.permute.xlu0 2
  %52 = vperm.xlu0 %51, %v27
  %v53 = vpop.permute.xlu0 %52
  %v55 = vlaneseq
  %v56 = vshrl.u32 %v55, 7
  %v57 = vsub.s32 0, %v56
  %v58 = vrot.slane %v50, %v57
  %v59 = vmul.f32 %v53, %v58
  %v60 = vadd.f32 %v49, %v59
  %v61 = vld [vmem:[%s2] sm:$0x1]
  %v63 = vlaneseq
  %v64 = vshrl.u32 %v63, 7
  %v65 = vsub.s32 0, %v64
  %v66 = vrot.slane %v61, %v65
  %v68 = vadd.f32 %v60, %v66
  %v69 = vtanh.pop %v68
  %v70 = vpack.c.bf16 %v69, %v69
  %v71 = vld [vmem:[%s3] sm:$0xf]
  %v72 = vld [vmem:[%s3 + $0x4] sm:$0xf]
  %v73 = vld [vmem:[%s3 + $0x8] sm:$0xf]
  %v74 = vld [vmem:[%s3 + $0xc] sm:$0xf]
  %v75 = vld [vmem:[%s3 + $0x10] sm:$0xf]
  %v76 = vld [vmem:[%s3 + $0x14] sm:$0xf]
  %v77 = vld [vmem:[%s3 + $0x18] sm:$0xf]
  %v78 = vld [vmem:[%s3 + $0x1c] sm:$0xf]
  %v79 = vld [vmem:[%s4] sm:$0x1]
  %v81 = vlaneseq
  %v82 = vshrl.u32 %v81, 7
  %v83 = vsub.s32 0, %v82
  %v84 = vrot.slane %v79, %v83
  %v94 = vunpack.c.l.b16 %v71
  %v95 = vunpack.c.l.b16 %v72
  %v96 = vunpack.c.l.b16 %v73
  %v97 = vunpack.c.l.b16 %v74
  %v98 = vunpack.c.l.b16 %v75
  %v99 = vunpack.c.l.b16 %v76
  %v100 = vunpack.c.l.b16 %v77
  %v101 = vunpack.c.l.b16 %v78
  %v102 = vpack.c.b16 %v95, %v94
  %v103 = vpack.c.b16 %v97, %v96
  %v104 = vpack.c.b16 %v99, %v98
  %v105 = vpack.c.b16 %v101, %v100
  %vm110 = vcmask 523264
  %v112 = vsel %vm110, %v70, 0
  %114 = vmatprep.subr.bf16.mxu0 0
  %115 = vmatpush1.bf16.msra.mxu0 0
  %116 = vmatprep.subr.bf16.mxu0 0
  %117 = vmatpush1.bf16.msra.mxu0 0
  %118 = vmatprep.subr.bf16.mxu0 0
  %119 = vmatpush1.bf16.msra.mxu0 0
  %120 = vmatprep.subr.bf16.mxu0 0
  %121 = vmatpush1.bf16.msra.mxu0 0
  %122 = vmatprep.subr.bf16.mxu0 0
  %123 = vmatpush1.bf16.msra.mxu0 %v105
  %124 = vmatprep.subr.bf16.mxu0 0
  %125 = vmatpush1.bf16.msra.mxu0 %v104
  %126 = vmatprep.subr.bf16.mxu0 0
  %127 = vmatpush1.bf16.msra.mxu0 %v103
  %128 = vmatprep.subr.bf16.mxu0 0
  %129 = vmatpush1.bf16.msra.mxu0 %v102
  %130 = vmatprep.subr.bf16.mxu0 0
  %131 = vmatpush2.bf16.msra.mxu0 0
  %132 = vmatprep.subr.bf16.mxu0 0
  %133 = vmatpush2.bf16.msra.mxu0 0
  %134 = vmatprep.subr.bf16.mxu0 0
  %135 = vmatpush2.bf16.msra.mxu0 0
  %136 = vmatprep.subr.bf16.mxu0 0
  %137 = vmatpush2.bf16.msra.mxu0 0
  %138 = vmatprep.subr.bf16.mxu0 0
  %139 = vmatpush2.bf16.msra.mxu0 0
  %140 = vmatprep.subr.bf16.mxu0 0
  %141 = vmatpush2.bf16.msra.mxu0 0
  %142 = vmatprep.subr.bf16.mxu0 0
  %143 = vmatpush2.bf16.msra.mxu0 0
  %144 = vmatprep.subr.bf16.mxu0 0
  %145 = vmatpush2.bf16.msra.mxu0 0
  %146 = vmatprep.mubr.bf16.mxu0 0
  %147 = vmatmul.mubr.bf16.gmra.mxu0 %v112
  %v148 = vpop.f32.mrf.mxu0
  %v149 = vadd.f32 %v84, %v148
  %v150 = vpop.f32.mrf.mxu0
  %v151 = vpop.f32.mrf.mxu0
  %v152 = vpop.f32.mrf.mxu0
  %153 = vdwg.mxu0
  %v154 = vtanh.pop %v149
  %v155 = vpack.c.bf16 %v154, %v154
  %s156 = scalar_lea.vmem %s3, 32
  %v157 = vld [vmem:[%s156] sm:$0xf]
  %v158 = vld [vmem:[%s156 + $0x4] sm:$0xf]
  %v159 = vld [vmem:[%s156 + $0x8] sm:$0xf]
  %v160 = vld [vmem:[%s156 + $0xc] sm:$0xf]
  %v161 = vld [vmem:[%s156 + $0x10] sm:$0xf]
  %v162 = vld [vmem:[%s156 + $0x14] sm:$0xf]
  %v163 = vld [vmem:[%s156 + $0x18] sm:$0xf]
  %v164 = vld [vmem:[%s156 + $0x1c] sm:$0xf]
  %s165 = scalar_lea.vmem %s4, 1
  %v166 = vld [vmem:[%s165] sm:$0x1]
  %v168 = vlaneseq
  %v169 = vshrl.u32 %v168, 7
  %v170 = vsub.s32 0, %v169
  %v171 = vrot.slane %v166, %v170
  %v181 = vunpack.c.l.b16 %v157
  %v182 = vunpack.c.l.b16 %v158
  %v183 = vunpack.c.l.b16 %v159
  %v184 = vunpack.c.l.b16 %v160
  %v185 = vunpack.c.l.b16 %v161
  %v186 = vunpack.c.l.b16 %v162
  %v187 = vunpack.c.l.b16 %v163
  %v188 = vunpack.c.l.b16 %v164
  %v189 = vpack.c.b16 %v182, %v181
  %v190 = vpack.c.b16 %v184, %v183
  %v191 = vpack.c.b16 %v186, %v185
  %v192 = vpack.c.b16 %v188, %v187
  %v198 = vsel %vm110, %v155, 0
  %200 = vmatprep.subr.bf16.mxu0 0
  %201 = vmatpush1.bf16.msra.mxu0 0
  %202 = vmatprep.subr.bf16.mxu0 0
  %203 = vmatpush1.bf16.msra.mxu0 0
  %204 = vmatprep.subr.bf16.mxu0 0
  %205 = vmatpush1.bf16.msra.mxu0 0
  %206 = vmatprep.subr.bf16.mxu0 0
  %207 = vmatpush1.bf16.msra.mxu0 0
  %208 = vmatprep.subr.bf16.mxu0 0
  %209 = vmatpush1.bf16.msra.mxu0 %v192
  %210 = vmatprep.subr.bf16.mxu0 0
  %211 = vmatpush1.bf16.msra.mxu0 %v191
  %212 = vmatprep.subr.bf16.mxu0 0
  %213 = vmatpush1.bf16.msra.mxu0 %v190
  %214 = vmatprep.subr.bf16.mxu0 0
  %215 = vmatpush1.bf16.msra.mxu0 %v189
  %216 = vmatprep.subr.bf16.mxu0 0
  %217 = vmatpush2.bf16.msra.mxu0 0
  %218 = vmatprep.subr.bf16.mxu0 0
  %219 = vmatpush2.bf16.msra.mxu0 0
  %220 = vmatprep.subr.bf16.mxu0 0
  %221 = vmatpush2.bf16.msra.mxu0 0
  %222 = vmatprep.subr.bf16.mxu0 0
  %223 = vmatpush2.bf16.msra.mxu0 0
  %224 = vmatprep.subr.bf16.mxu0 0
  %225 = vmatpush2.bf16.msra.mxu0 0
  %226 = vmatprep.subr.bf16.mxu0 0
  %227 = vmatpush2.bf16.msra.mxu0 0
  %228 = vmatprep.subr.bf16.mxu0 0
  %229 = vmatpush2.bf16.msra.mxu0 0
  %230 = vmatprep.subr.bf16.mxu0 0
  %231 = vmatpush2.bf16.msra.mxu0 0
  %232 = vmatprep.mubr.bf16.mxu0 0
  %233 = vmatmul.mubr.bf16.gmra.mxu0 %v198
  %v234 = vpop.f32.mrf.mxu0
  %v235 = vadd.f32 %v171, %v234
  %v236 = vpop.f32.mrf.mxu0
  %v237 = vpop.f32.mrf.mxu0
  %v238 = vpop.f32.mrf.mxu0
  %239 = vdwg.mxu0
  %v240 = vtanh.pop %v235
  %v241 = vpack.c.bf16 %v240, %v240
  %s242 = scalar_lea.vmem %s3, 64
  %v243 = vld [vmem:[%s242] sm:$0xf]
  %v244 = vld [vmem:[%s242 + $0x4] sm:$0xf]
  %v245 = vld [vmem:[%s242 + $0x8] sm:$0xf]
  %v246 = vld [vmem:[%s242 + $0xc] sm:$0xf]
  %v247 = vld [vmem:[%s242 + $0x10] sm:$0xf]
  %v248 = vld [vmem:[%s242 + $0x14] sm:$0xf]
  %v249 = vld [vmem:[%s242 + $0x18] sm:$0xf]
  %v250 = vld [vmem:[%s242 + $0x1c] sm:$0xf]
  %s251 = scalar_lea.vmem %s4, 2
  %v252 = vld [vmem:[%s251] sm:$0x1]
  %v254 = vlaneseq
  %v255 = vshrl.u32 %v254, 7
  %v256 = vsub.s32 0, %v255
  %v257 = vrot.slane %v252, %v256
  %v267 = vunpack.c.l.b16 %v243
  %v268 = vunpack.c.l.b16 %v244
  %v269 = vunpack.c.l.b16 %v245
  %v270 = vunpack.c.l.b16 %v246
  %v271 = vunpack.c.l.b16 %v247
  %v272 = vunpack.c.l.b16 %v248
  %v273 = vunpack.c.l.b16 %v249
  %v274 = vunpack.c.l.b16 %v250
  %v275 = vpack.c.b16 %v268, %v267
  %v276 = vpack.c.b16 %v270, %v269
  %v277 = vpack.c.b16 %v272, %v271
  %v278 = vpack.c.b16 %v274, %v273
  %v284 = vsel %vm110, %v241, 0
  %286 = vmatprep.subr.bf16.mxu0 0
  %287 = vmatpush1.bf16.msra.mxu0 0
  %288 = vmatprep.subr.bf16.mxu0 0
  %289 = vmatpush1.bf16.msra.mxu0 0
  %290 = vmatprep.subr.bf16.mxu0 0
  %291 = vmatpush1.bf16.msra.mxu0 0
  %292 = vmatprep.subr.bf16.mxu0 0
  %293 = vmatpush1.bf16.msra.mxu0 0
  %294 = vmatprep.subr.bf16.mxu0 0
  %295 = vmatpush1.bf16.msra.mxu0 %v278
  %296 = vmatprep.subr.bf16.mxu0 0
  %297 = vmatpush1.bf16.msra.mxu0 %v277
  %298 = vmatprep.subr.bf16.mxu0 0
  %299 = vmatpush1.bf16.msra.mxu0 %v276
  %300 = vmatprep.subr.bf16.mxu0 0
  %301 = vmatpush1.bf16.msra.mxu0 %v275
  %302 = vmatprep.subr.bf16.mxu0 0
  %303 = vmatpush2.bf16.msra.mxu0 0
  %304 = vmatprep.subr.bf16.mxu0 0
  %305 = vmatpush2.bf16.msra.mxu0 0
  %306 = vmatprep.subr.bf16.mxu0 0
  %307 = vmatpush2.bf16.msra.mxu0 0
  %308 = vmatprep.subr.bf16.mxu0 0
  %309 = vmatpush2.bf16.msra.mxu0 0
  %310 = vmatprep.subr.bf16.mxu0 0
  %311 = vmatpush2.bf16.msra.mxu0 0
  %312 = vmatprep.subr.bf16.mxu0 0
  %313 = vmatpush2.bf16.msra.mxu0 0
  %314 = vmatprep.subr.bf16.mxu0 0
  %315 = vmatpush2.bf16.msra.mxu0 0
  %316 = vmatprep.subr.bf16.mxu0 0
  %317 = vmatpush2.bf16.msra.mxu0 0
  %318 = vmatprep.mubr.bf16.mxu0 0
  %319 = vmatmul.mubr.bf16.gmra.mxu0 %v284
  %v320 = vpop.f32.mrf.mxu0
  %v321 = vadd.f32 %v257, %v320
  %v322 = vpop.f32.mrf.mxu0
  %v323 = vpop.f32.mrf.mxu0
  %v324 = vpop.f32.mrf.mxu0
  %325 = vdwg.mxu0
  %v326 = vtanh.pop %v321
  %v327 = vpack.c.bf16 %v326, %v326
  %s328 = scalar_lea.vmem %s3, 96
  %v329 = vld [vmem:[%s328] sm:$0xf]
  %v330 = vld [vmem:[%s328 + $0x4] sm:$0xf]
  %v331 = vld [vmem:[%s328 + $0x8] sm:$0xf]
  %v332 = vld [vmem:[%s328 + $0xc] sm:$0xf]
  %v333 = vld [vmem:[%s328 + $0x10] sm:$0xf]
  %v334 = vld [vmem:[%s328 + $0x14] sm:$0xf]
  %v335 = vld [vmem:[%s328 + $0x18] sm:$0xf]
  %v336 = vld [vmem:[%s328 + $0x1c] sm:$0xf]
  %s337 = scalar_lea.vmem %s4, 3
  %v338 = vld [vmem:[%s337] sm:$0x1]
  %v340 = vlaneseq
  %v341 = vshrl.u32 %v340, 7
  %v342 = vsub.s32 0, %v341
  %v343 = vrot.slane %v338, %v342
  %v353 = vunpack.c.l.b16 %v329
  %v354 = vunpack.c.l.b16 %v330
  %v355 = vunpack.c.l.b16 %v331
  %v356 = vunpack.c.l.b16 %v332
  %v357 = vunpack.c.l.b16 %v333
  %v358 = vunpack.c.l.b16 %v334
  %v359 = vunpack.c.l.b16 %v335
  %v360 = vunpack.c.l.b16 %v336
  %v361 = vpack.c.b16 %v354, %v353
  %v362 = vpack.c.b16 %v356, %v355
  %v363 = vpack.c.b16 %v358, %v357
  %v364 = vpack.c.b16 %v360, %v359
  %v370 = vsel %vm110, %v327, 0
  %372 = vmatprep.subr.bf16.mxu0 0
  %373 = vmatpush1.bf16.msra.mxu0 0
  %374 = vmatprep.subr.bf16.mxu0 0
  %375 = vmatpush1.bf16.msra.mxu0 0
  %376 = vmatprep.subr.bf16.mxu0 0
  %377 = vmatpush1.bf16.msra.mxu0 0
  %378 = vmatprep.subr.bf16.mxu0 0
  %379 = vmatpush1.bf16.msra.mxu0 0
  %380 = vmatprep.subr.bf16.mxu0 0
  %381 = vmatpush1.bf16.msra.mxu0 %v364
  %382 = vmatprep.subr.bf16.mxu0 0
  %383 = vmatpush1.bf16.msra.mxu0 %v363
  %384 = vmatprep.subr.bf16.mxu0 0
  %385 = vmatpush1.bf16.msra.mxu0 %v362
  %386 = vmatprep.subr.bf16.mxu0 0
  %387 = vmatpush1.bf16.msra.mxu0 %v361
  %388 = vmatprep.subr.bf16.mxu0 0
  %389 = vmatpush2.bf16.msra.mxu0 0
  %390 = vmatprep.subr.bf16.mxu0 0
  %391 = vmatpush2.bf16.msra.mxu0 0
  %392 = vmatprep.subr.bf16.mxu0 0
  %393 = vmatpush2.bf16.msra.mxu0 0
  %394 = vmatprep.subr.bf16.mxu0 0
  %395 = vmatpush2.bf16.msra.mxu0 0
  %396 = vmatprep.subr.bf16.mxu0 0
  %397 = vmatpush2.bf16.msra.mxu0 0
  %398 = vmatprep.subr.bf16.mxu0 0
  %399 = vmatpush2.bf16.msra.mxu0 0
  %400 = vmatprep.subr.bf16.mxu0 0
  %401 = vmatpush2.bf16.msra.mxu0 0
  %402 = vmatprep.subr.bf16.mxu0 0
  %403 = vmatpush2.bf16.msra.mxu0 0
  %404 = vmatprep.mubr.bf16.mxu0 0
  %405 = vmatmul.mubr.bf16.gmra.mxu0 %v370
  %v406 = vpop.f32.mrf.mxu0
  %v407 = vadd.f32 %v343, %v406
  %v408 = vpop.f32.mrf.mxu0
  %v409 = vpop.f32.mrf.mxu0
  %v410 = vpop.f32.mrf.mxu0
  %411 = vdwg.mxu0
  %v412 = vtanh.pop %v407
  %v413 = vpack.c.bf16 %v412, %v412
  %s414 = scalar_lea.vmem %s3, 128
  %v415 = vld [vmem:[%s414] sm:$0xf]
  %v416 = vld [vmem:[%s414 + $0x4] sm:$0xf]
  %v417 = vld [vmem:[%s414 + $0x8] sm:$0xf]
  %v418 = vld [vmem:[%s414 + $0xc] sm:$0xf]
  %v419 = vld [vmem:[%s414 + $0x10] sm:$0xf]
  %v420 = vld [vmem:[%s414 + $0x14] sm:$0xf]
  %v421 = vld [vmem:[%s414 + $0x18] sm:$0xf]
  %v422 = vld [vmem:[%s414 + $0x1c] sm:$0xf]
  %s423 = scalar_lea.vmem %s4, 4
  %v424 = vld [vmem:[%s423] sm:$0x1]
  %v426 = vlaneseq
  %v427 = vshrl.u32 %v426, 7
  %v428 = vsub.s32 0, %v427
  %v429 = vrot.slane %v424, %v428
  %v439 = vunpack.c.l.b16 %v415
  %v440 = vunpack.c.l.b16 %v416
  %v441 = vunpack.c.l.b16 %v417
  %v442 = vunpack.c.l.b16 %v418
  %v443 = vunpack.c.l.b16 %v419
  %v444 = vunpack.c.l.b16 %v420
  %v445 = vunpack.c.l.b16 %v421
  %v446 = vunpack.c.l.b16 %v422
  %v447 = vpack.c.b16 %v440, %v439
  %v448 = vpack.c.b16 %v442, %v441
  %v449 = vpack.c.b16 %v444, %v443
  %v450 = vpack.c.b16 %v446, %v445
  %v456 = vsel %vm110, %v413, 0
  %458 = vmatprep.subr.bf16.mxu0 0
  %459 = vmatpush1.bf16.msra.mxu0 0
  %460 = vmatprep.subr.bf16.mxu0 0
  %461 = vmatpush1.bf16.msra.mxu0 0
  %462 = vmatprep.subr.bf16.mxu0 0
  %463 = vmatpush1.bf16.msra.mxu0 0
  %464 = vmatprep.subr.bf16.mxu0 0
  %465 = vmatpush1.bf16.msra.mxu0 0
  %466 = vmatprep.subr.bf16.mxu0 0
  %467 = vmatpush1.bf16.msra.mxu0 %v450
  %468 = vmatprep.subr.bf16.mxu0 0
  %469 = vmatpush1.bf16.msra.mxu0 %v449
  %470 = vmatprep.subr.bf16.mxu0 0
  %471 = vmatpush1.bf16.msra.mxu0 %v448
  %472 = vmatprep.subr.bf16.mxu0 0
  %473 = vmatpush1.bf16.msra.mxu0 %v447
  %474 = vmatprep.subr.bf16.mxu0 0
  %475 = vmatpush2.bf16.msra.mxu0 0
  %476 = vmatprep.subr.bf16.mxu0 0
  %477 = vmatpush2.bf16.msra.mxu0 0
  %478 = vmatprep.subr.bf16.mxu0 0
  %479 = vmatpush2.bf16.msra.mxu0 0
  %480 = vmatprep.subr.bf16.mxu0 0
  %481 = vmatpush2.bf16.msra.mxu0 0
  %482 = vmatprep.subr.bf16.mxu0 0
  %483 = vmatpush2.bf16.msra.mxu0 0
  %484 = vmatprep.subr.bf16.mxu0 0
  %485 = vmatpush2.bf16.msra.mxu0 0
  %486 = vmatprep.subr.bf16.mxu0 0
  %487 = vmatpush2.bf16.msra.mxu0 0
  %488 = vmatprep.subr.bf16.mxu0 0
  %489 = vmatpush2.bf16.msra.mxu0 0
  %490 = vmatprep.mubr.bf16.mxu0 0
  %491 = vmatmul.mubr.bf16.gmra.mxu0 %v456
  %v492 = vpop.f32.mrf.mxu0
  %v493 = vadd.f32 %v429, %v492
  %v494 = vpop.f32.mrf.mxu0
  %v495 = vpop.f32.mrf.mxu0
  %v496 = vpop.f32.mrf.mxu0
  %497 = vdwg.mxu0
  %v498 = vtanh.pop %v493
  %v499 = vpack.c.bf16 %v498, %v498
  %s500 = scalar_lea.vmem %s3, 160
  %v501 = vld [vmem:[%s500] sm:$0xf]
  %v502 = vld [vmem:[%s500 + $0x4] sm:$0xf]
  %v503 = vld [vmem:[%s500 + $0x8] sm:$0xf]
  %v504 = vld [vmem:[%s500 + $0xc] sm:$0xf]
  %v505 = vld [vmem:[%s500 + $0x10] sm:$0xf]
  %v506 = vld [vmem:[%s500 + $0x14] sm:$0xf]
  %v507 = vld [vmem:[%s500 + $0x18] sm:$0xf]
  %v508 = vld [vmem:[%s500 + $0x1c] sm:$0xf]
  %s509 = scalar_lea.vmem %s4, 5
  %v510 = vld [vmem:[%s509] sm:$0x1]
  %v512 = vlaneseq
  %v513 = vshrl.u32 %v512, 7
  %v514 = vsub.s32 0, %v513
  %v515 = vrot.slane %v510, %v514
  %v525 = vunpack.c.l.b16 %v501
  %v526 = vunpack.c.l.b16 %v502
  %v527 = vunpack.c.l.b16 %v503
  %v528 = vunpack.c.l.b16 %v504
  %v529 = vunpack.c.l.b16 %v505
  %v530 = vunpack.c.l.b16 %v506
  %v531 = vunpack.c.l.b16 %v507
  %v532 = vunpack.c.l.b16 %v508
  %v533 = vpack.c.b16 %v526, %v525
  %v534 = vpack.c.b16 %v528, %v527
  %v535 = vpack.c.b16 %v530, %v529
  %v536 = vpack.c.b16 %v532, %v531
  %v542 = vsel %vm110, %v499, 0
  %544 = vmatprep.subr.bf16.mxu0 0
  %545 = vmatpush1.bf16.msra.mxu0 0
  %546 = vmatprep.subr.bf16.mxu0 0
  %547 = vmatpush1.bf16.msra.mxu0 0
  %548 = vmatprep.subr.bf16.mxu0 0
  %549 = vmatpush1.bf16.msra.mxu0 0
  %550 = vmatprep.subr.bf16.mxu0 0
  %551 = vmatpush1.bf16.msra.mxu0 0
  %552 = vmatprep.subr.bf16.mxu0 0
  %553 = vmatpush1.bf16.msra.mxu0 %v536
  %554 = vmatprep.subr.bf16.mxu0 0
  %555 = vmatpush1.bf16.msra.mxu0 %v535
  %556 = vmatprep.subr.bf16.mxu0 0
  %557 = vmatpush1.bf16.msra.mxu0 %v534
  %558 = vmatprep.subr.bf16.mxu0 0
  %559 = vmatpush1.bf16.msra.mxu0 %v533
  %560 = vmatprep.subr.bf16.mxu0 0
  %561 = vmatpush2.bf16.msra.mxu0 0
  %562 = vmatprep.subr.bf16.mxu0 0
  %563 = vmatpush2.bf16.msra.mxu0 0
  %564 = vmatprep.subr.bf16.mxu0 0
  %565 = vmatpush2.bf16.msra.mxu0 0
  %566 = vmatprep.subr.bf16.mxu0 0
  %567 = vmatpush2.bf16.msra.mxu0 0
  %568 = vmatprep.subr.bf16.mxu0 0
  %569 = vmatpush2.bf16.msra.mxu0 0
  %570 = vmatprep.subr.bf16.mxu0 0
  %571 = vmatpush2.bf16.msra.mxu0 0
  %572 = vmatprep.subr.bf16.mxu0 0
  %573 = vmatpush2.bf16.msra.mxu0 0
  %574 = vmatprep.subr.bf16.mxu0 0
  %575 = vmatpush2.bf16.msra.mxu0 0
  %576 = vmatprep.mubr.bf16.mxu0 0
  %577 = vmatmul.mubr.bf16.gmra.mxu0 %v542
  %v578 = vpop.f32.mrf.mxu0
  %v579 = vadd.f32 %v515, %v578
  %v580 = vpop.f32.mrf.mxu0
  %v581 = vpop.f32.mrf.mxu0
  %v582 = vpop.f32.mrf.mxu0
  %583 = vdwg.mxu0
  %v584 = vtanh.pop %v579
  %v585 = vpack.c.bf16 %v584, %v584
  %s586 = scalar_lea.vmem %s3, 192
  %v587 = vld [vmem:[%s586] sm:$0xf]
  %v588 = vld [vmem:[%s586 + $0x4] sm:$0xf]
  %v589 = vld [vmem:[%s586 + $0x8] sm:$0xf]
  %v590 = vld [vmem:[%s586 + $0xc] sm:$0xf]
  %v591 = vld [vmem:[%s586 + $0x10] sm:$0xf]
  %v592 = vld [vmem:[%s586 + $0x14] sm:$0xf]
  %v593 = vld [vmem:[%s586 + $0x18] sm:$0xf]
  %v594 = vld [vmem:[%s586 + $0x1c] sm:$0xf]
  %s595 = scalar_lea.vmem %s4, 6
  %v596 = vld [vmem:[%s595] sm:$0x1]
  %v598 = vlaneseq
  %v599 = vshrl.u32 %v598, 7
  %v600 = vsub.s32 0, %v599
  %v601 = vrot.slane %v596, %v600
  %v611 = vunpack.c.l.b16 %v587
  %v612 = vunpack.c.l.b16 %v588
  %v613 = vunpack.c.l.b16 %v589
  %v614 = vunpack.c.l.b16 %v590
  %v615 = vunpack.c.l.b16 %v591
  %v616 = vunpack.c.l.b16 %v592
  %v617 = vunpack.c.l.b16 %v593
  %v618 = vunpack.c.l.b16 %v594
  %v619 = vpack.c.b16 %v612, %v611
  %v620 = vpack.c.b16 %v614, %v613
  %v621 = vpack.c.b16 %v616, %v615
  %v622 = vpack.c.b16 %v618, %v617
  %v628 = vsel %vm110, %v585, 0
  %630 = vmatprep.subr.bf16.mxu0 0
  %631 = vmatpush1.bf16.msra.mxu0 0
  %632 = vmatprep.subr.bf16.mxu0 0
  %633 = vmatpush1.bf16.msra.mxu0 0
  %634 = vmatprep.subr.bf16.mxu0 0
  %635 = vmatpush1.bf16.msra.mxu0 0
  %636 = vmatprep.subr.bf16.mxu0 0
  %637 = vmatpush1.bf16.msra.mxu0 0
  %638 = vmatprep.subr.bf16.mxu0 0
  %639 = vmatpush1.bf16.msra.mxu0 %v622
  %640 = vmatprep.subr.bf16.mxu0 0
  %641 = vmatpush1.bf16.msra.mxu0 %v621
  %642 = vmatprep.subr.bf16.mxu0 0
  %643 = vmatpush1.bf16.msra.mxu0 %v620
  %644 = vmatprep.subr.bf16.mxu0 0
  %645 = vmatpush1.bf16.msra.mxu0 %v619
  %646 = vmatprep.subr.bf16.mxu0 0
  %647 = vmatpush2.bf16.msra.mxu0 0
  %648 = vmatprep.subr.bf16.mxu0 0
  %649 = vmatpush2.bf16.msra.mxu0 0
  %650 = vmatprep.subr.bf16.mxu0 0
  %651 = vmatpush2.bf16.msra.mxu0 0
  %652 = vmatprep.subr.bf16.mxu0 0
  %653 = vmatpush2.bf16.msra.mxu0 0
  %654 = vmatprep.subr.bf16.mxu0 0
  %655 = vmatpush2.bf16.msra.mxu0 0
  %656 = vmatprep.subr.bf16.mxu0 0
  %657 = vmatpush2.bf16.msra.mxu0 0
  %658 = vmatprep.subr.bf16.mxu0 0
  %659 = vmatpush2.bf16.msra.mxu0 0
  %660 = vmatprep.subr.bf16.mxu0 0
  %661 = vmatpush2.bf16.msra.mxu0 0
  %662 = vmatprep.mubr.bf16.mxu0 0
  %663 = vmatmul.mubr.bf16.gmra.mxu0 %v628
  %v664 = vpop.f32.mrf.mxu0
  %v665 = vadd.f32 %v601, %v664
  %v666 = vpop.f32.mrf.mxu0
  %v667 = vpop.f32.mrf.mxu0
  %v668 = vpop.f32.mrf.mxu0
  %669 = vdwg.mxu0
  %v670 = vtanh.pop %v665
  %v671 = vpack.c.bf16 %v670, %v670
  %s672 = scalar_lea.vmem %s3, 224
  %v673 = vld [vmem:[%s672] sm:$0xf]
  %v674 = vld [vmem:[%s672 + $0x4] sm:$0xf]
  %v675 = vld [vmem:[%s672 + $0x8] sm:$0xf]
  %v676 = vld [vmem:[%s672 + $0xc] sm:$0xf]
  %v677 = vld [vmem:[%s672 + $0x10] sm:$0xf]
  %v678 = vld [vmem:[%s672 + $0x14] sm:$0xf]
  %v679 = vld [vmem:[%s672 + $0x18] sm:$0xf]
  %v680 = vld [vmem:[%s672 + $0x1c] sm:$0xf]
  %s681 = scalar_lea.vmem %s4, 7
  %v682 = vld [vmem:[%s681] sm:$0x1]
  %v684 = vlaneseq
  %v685 = vshrl.u32 %v684, 7
  %v686 = vsub.s32 0, %v685
  %v687 = vrot.slane %v682, %v686
  %v697 = vunpack.c.l.b16 %v673
  %v698 = vunpack.c.l.b16 %v674
  %v699 = vunpack.c.l.b16 %v675
  %v700 = vunpack.c.l.b16 %v676
  %v701 = vunpack.c.l.b16 %v677
  %v702 = vunpack.c.l.b16 %v678
  %v703 = vunpack.c.l.b16 %v679
  %v704 = vunpack.c.l.b16 %v680
  %v705 = vpack.c.b16 %v698, %v697
  %v706 = vpack.c.b16 %v700, %v699
  %v707 = vpack.c.b16 %v702, %v701
  %v708 = vpack.c.b16 %v704, %v703
  %v714 = vsel %vm110, %v671, 0
  %716 = vmatprep.subr.bf16.mxu0 0
  %717 = vmatpush1.bf16.msra.mxu0 0
  %718 = vmatprep.subr.bf16.mxu0 0
  %719 = vmatpush1.bf16.msra.mxu0 0
  %720 = vmatprep.subr.bf16.mxu0 0
  %721 = vmatpush1.bf16.msra.mxu0 0
  %722 = vmatprep.subr.bf16.mxu0 0
  %723 = vmatpush1.bf16.msra.mxu0 0
  %724 = vmatprep.subr.bf16.mxu0 0
  %725 = vmatpush1.bf16.msra.mxu0 %v708
  %726 = vmatprep.subr.bf16.mxu0 0
  %727 = vmatpush1.bf16.msra.mxu0 %v707
  %728 = vmatprep.subr.bf16.mxu0 0
  %729 = vmatpush1.bf16.msra.mxu0 %v706
  %730 = vmatprep.subr.bf16.mxu0 0
  %731 = vmatpush1.bf16.msra.mxu0 %v705
  %732 = vmatprep.subr.bf16.mxu0 0
  %733 = vmatpush2.bf16.msra.mxu0 0
  %734 = vmatprep.subr.bf16.mxu0 0
  %735 = vmatpush2.bf16.msra.mxu0 0
  %736 = vmatprep.subr.bf16.mxu0 0
  %737 = vmatpush2.bf16.msra.mxu0 0
  %738 = vmatprep.subr.bf16.mxu0 0
  %739 = vmatpush2.bf16.msra.mxu0 0
  %740 = vmatprep.subr.bf16.mxu0 0
  %741 = vmatpush2.bf16.msra.mxu0 0
  %742 = vmatprep.subr.bf16.mxu0 0
  %743 = vmatpush2.bf16.msra.mxu0 0
  %744 = vmatprep.subr.bf16.mxu0 0
  %745 = vmatpush2.bf16.msra.mxu0 0
  %746 = vmatprep.subr.bf16.mxu0 0
  %747 = vmatpush2.bf16.msra.mxu0 0
  %748 = vmatprep.mubr.bf16.mxu0 0
  %749 = vmatmul.mubr.bf16.gmra.mxu0 %v714
  %v750 = vpop.f32.mrf.mxu0
  %v751 = vadd.f32 %v687, %v750
  %v752 = vpop.f32.mrf.mxu0
  %v753 = vpop.f32.mrf.mxu0
  %v754 = vpop.f32.mrf.mxu0
  %755 = vdwg.mxu0
  %v756 = vtanh.pop %v751
  %v757 = vpack.c.bf16 %v756, %v756
  %v758 = vld [vmem:[%s5] sm:$0xf]
  %v759 = vld [vmem:[%s5 + $0x4] sm:$0xf]
  %v760 = vld [vmem:[%s5 + $0x8] sm:$0xf]
  %v761 = vld [vmem:[%s5 + $0xc] sm:$0xf]
  %v762 = vld [vmem:[%s5 + $0x10] sm:$0xf]
  %v763 = vld [vmem:[%s5 + $0x14] sm:$0xf]
  %v764 = vld [vmem:[%s5 + $0x18] sm:$0xf]
  %v765 = vld [vmem:[%s5 + $0x1c] sm:$0xf]
  %v766 = vld [vmem:[%s6] sm:$0x1]
  %v768 = vlaneseq
  %v769 = vshrl.u32 %v768, 7
  %v770 = vsub.s32 0, %v769
  %v771 = vrot.slane %v766, %v770
  %v781 = vunpack.c.l.b16 %v758
  %v782 = vunpack.c.l.b16 %v759
  %v783 = vunpack.c.l.b16 %v760
  %v784 = vunpack.c.l.b16 %v761
  %v785 = vunpack.c.l.b16 %v762
  %v786 = vunpack.c.l.b16 %v763
  %v787 = vunpack.c.l.b16 %v764
  %v788 = vunpack.c.l.b16 %v765
  %v789 = vpack.c.b16 %v782, %v781
  %v790 = vpack.c.b16 %v784, %v783
  %v791 = vpack.c.b16 %v786, %v785
  %v792 = vpack.c.b16 %v788, %v787
  %v798 = vsel %vm110, %v757, 0
  %800 = vmatprep.subr.bf16.mxu0 0
  %801 = vmatpush1.bf16.msra.mxu0 0
  %802 = vmatprep.subr.bf16.mxu0 0
  %803 = vmatpush1.bf16.msra.mxu0 0
  %804 = vmatprep.subr.bf16.mxu0 0
  %805 = vmatpush1.bf16.msra.mxu0 0
  %806 = vmatprep.subr.bf16.mxu0 0
  %807 = vmatpush1.bf16.msra.mxu0 0
  %808 = vmatprep.subr.bf16.mxu0 0
  %809 = vmatpush1.bf16.msra.mxu0 %v792
  %810 = vmatprep.subr.bf16.mxu0 0
  %811 = vmatpush1.bf16.msra.mxu0 %v791
  %812 = vmatprep.subr.bf16.mxu0 0
  %813 = vmatpush1.bf16.msra.mxu0 %v790
  %814 = vmatprep.subr.bf16.mxu0 0
  %815 = vmatpush1.bf16.msra.mxu0 %v789
  %816 = vmatprep.subr.bf16.mxu0 0
  %817 = vmatpush2.bf16.msra.mxu0 0
  %818 = vmatprep.subr.bf16.mxu0 0
  %819 = vmatpush2.bf16.msra.mxu0 0
  %820 = vmatprep.subr.bf16.mxu0 0
  %821 = vmatpush2.bf16.msra.mxu0 0
  %822 = vmatprep.subr.bf16.mxu0 0
  %823 = vmatpush2.bf16.msra.mxu0 0
  %824 = vmatprep.subr.bf16.mxu0 0
  %825 = vmatpush2.bf16.msra.mxu0 0
  %826 = vmatprep.subr.bf16.mxu0 0
  %827 = vmatpush2.bf16.msra.mxu0 0
  %828 = vmatprep.subr.bf16.mxu0 0
  %829 = vmatpush2.bf16.msra.mxu0 0
  %830 = vmatprep.subr.bf16.mxu0 0
  %831 = vmatpush2.bf16.msra.mxu0 0
  %832 = vmatprep.mubr.bf16.mxu0 0
  %833 = vmatmul.mubr.bf16.gmra.mxu0 %v798
  %v834 = vpop.f32.mrf.mxu0
  %v835 = vadd.f32 %v771, %v834
  %v836 = vpop.f32.mrf.mxu0
  %v837 = vpop.f32.mrf.mxu0
  %v838 = vpop.f32.mrf.mxu0
  %839 = vdwg.mxu0
  %840 = vst [vmem:[%s7] sm:$0xff] %v835
  // Predicated region
  $region30: #{deep_model_forward.1} parent=0 // pred_check
    _
  $region31: #{deep_model_forward.1} parent=0 // pred_check_branch
    %842 = sbr.rel (0) target = $region33
  $region32: #{deep_model_forward.1} parent=0 // pred_region
    _
  $region33: #{deep_model_forward.1} parent=0 // pred_fallthru
    _
  // Predicated region
  $region34: #{deep_model_forward.1} parent=0 // pred_check
    _
  $region35: #{deep_model_forward.1} parent=0 // pred_check_branch
    %844 = sbr.rel (0) target = $region37
  $region36: #{deep_model_forward.1} parent=0 // pred_region
    _
  $region37: #{deep_model_forward.1} parent=0 // pred_fallthru
    _

</llo_original>
